<compile_context>
chip_gen: v7x
topology: tpu7x:2x2x1
jax: 0.10.0
libtpu: 0.0.40
codegen_flags: <defaults>
</compile_context>

<pallas_src>
import functools

import jax
import jax.numpy as jnp
from jax.experimental import pallas as pl
from jax.experimental.pallas import tpu as pltpu

LANE = 128
SUBLANE = 8


def _round_up(n: int, m: int) -> int:
    return ((n + m - 1) // m) * m


# ---------------------------------------------------------------------------
# Pallas kernel: the WHOLE autoencoder fused into one kernel body.
# refs = (x_ref, w0, b0, w1, b1, ..., w_{L-1}, b_{L-1}, o_ref)
# x_ref / o_ref are one (TM, D) batch tile; weights/biases are whole arrays
# kept VMEM-resident across the batch grid.
# ---------------------------------------------------------------------------
def _autoencoder_kernel(*refs, relu_flags):
    x_ref = refs[0]
    o_ref = refs[-1]
    wb_refs = refs[1:-1]

    h = x_ref[...].astype(jnp.float32)               # [TM, D0]
    for i, apply_relu in enumerate(relu_flags):       # static unroll over layers
        w = wb_refs[2 * i][...]                       # [Din(_pad), Dout(_pad)]
        b = wb_refs[2 * i + 1][...]                   # [1,  Dout(_pad)]
        # MXU matmul in the weights' dtype (f32 or bf16) with f32 accumulation.
        h = jnp.dot(h.astype(w.dtype), w, preferred_element_type=jnp.float32)
        h = h + b.astype(jnp.float32)
        if apply_relu:
            h = jnp.maximum(h, 0.0)
    o_ref[...] = h.astype(o_ref.dtype)


# ---------------------------------------------------------------------------
# Init-time parameter preparation (padding happens ONCE, not per forward call)
# ---------------------------------------------------------------------------
def prepare_autoencoder_params(enc_params, dec_params, *,
                               compute_dtype=jnp.float32, lane=LANE):
    """Pad all Linear weights/biases to lane-dense shapes once.

    enc_params / dec_params: lists of (w: [d_in, d_out], b: [d_out]).
    Returns a dict consumed by `autoencoder_apply`; reuse it across calls.
    """
    params = list(enc_params) + list(dec_params)
    # ReLU between Linear layers inside each MLP; the encoder latent
    # projection and the decoder output layer stay linear.
    # TODO(synk): Encoder/Decoder class bodies are not in the spec; ReLU
    #             placement is the standard "ReLU between Linear layers" MLP.
    relu_flags = (tuple(i < len(enc_params) - 1 for i in range(len(enc_params))) +
                  tuple(i < len(dec_params) - 1 for i in range(len(dec_params))))

    n = len(params)
    flat_wb = []
    for li, (w, b) in enumerate(params):
        di, do = w.shape
        # Layer 0 keeps its exact input dim (so x needs no padding); later
        # layers' input dims are padded to match the previous layer's padded
        # output.  The LAST layer keeps its exact output dim so the kernel
        # writes the true (batch, d_out) with no wrapper-side slice.
        di_p = di if li == 0 else _round_up(di, lane)
        do_p = do if li == n - 1 else _round_up(do, lane)
        w_p = jnp.pad(w, ((0, di_p - di), (0, do_p - do))).astype(compute_dtype)
        b_p = jnp.pad(b.reshape(1, do), ((0, 0), (0, do_p - do))).astype(compute_dtype)
        flat_wb += [w_p, b_p]

    return {
        "flat_wb": flat_wb,
        "relu_flags": relu_flags,
        "d_in": params[0][0].shape[0],
        "d_out": params[-1][0].shape[1],
    }


# ---------------------------------------------------------------------------
# Forward path: one pallas_call, no pads, no slices.
# ---------------------------------------------------------------------------
def autoencoder_apply(x, prepared, *, block_m=128):
    flat_wb = prepared["flat_wb"]
    relu_flags = prepared["relu_flags"]
    d_in, d_out = prepared["d_in"], prepared["d_out"]

    batch = x.shape[0]
    assert x.shape == (batch, d_in), x.shape

    # Batch tile: activations pipelined in TM-row tiles, weights VMEM-resident.
    tm = min(block_m, _round_up(batch, SUBLANE))
    grid = (pl.cdiv(batch, tm),)

    in_specs = [pl.BlockSpec((tm, d_in), lambda i: (i, 0))]
    for arr in flat_wb:
        in_specs.append(pl.BlockSpec(arr.shape, lambda i: (0, 0)))
    out_specs = pl.BlockSpec((tm, d_out), lambda i: (i, 0))

    itemsize = jnp.dtype(x.dtype).itemsize
    weight_bytes = sum(int(a.size) * jnp.dtype(a.dtype).itemsize for a in flat_wb)
    max_feat = max([d_in, d_out] + [a.shape[-1] for a in flat_wb])
    # Weights (double-buffered by the pipeline) + activation tiles + headroom,
    # capped at 48 MiB so the same plan fits v7x's 64 MiB VMEM.
    est = 2 * (weight_bytes + tm * d_in * itemsize + tm * d_out * itemsize) \
        + 4 * tm * max_feat * 4
    vmem_limit = int(min(max(2 * est, 16 * 2**20), 48 * 2**20))

    flops = 2 * batch * sum(int(w.shape[0]) * int(w.shape[1]) for w in flat_wb[::2])
    bytes_accessed = (batch * d_in * itemsize + weight_bytes
                      + batch * d_out * itemsize)

    kernel = functools.partial(_autoencoder_kernel, relu_flags=relu_flags)
    return pl.pallas_call(
        kernel,
        out_shape=jax.ShapeDtypeStruct((batch, d_out), x.dtype),
        grid=grid,
        in_specs=in_specs,
        out_specs=out_specs,
        compiler_params=pltpu.CompilerParams(
            dimension_semantics=("parallel",),
            vmem_limit_bytes=vmem_limit,
        ),
        cost_estimate=pl.CostEstimate(
            flops=flops, transcendentals=0, bytes_accessed=bytes_accessed),
    )(x, *flat_wb)


# ---------------------------------------------------------------------------
# Encoder / Decoder / AutoEncoder parameter setup (plain JAX glue)
# ---------------------------------------------------------------------------
def init_mlp_params(key, layer_sizes, dtype=jnp.float32):
    """Deterministic Linear-layer parameters for the given layer_sizes chain."""
    params = []
    for li, (d_in, d_out) in enumerate(zip(layer_sizes[:-1], layer_sizes[1:])):
        k_w, k_b, key = jax.random.split(jax.random.fold_in(key, li), 3)
        scale = 1.0 / jnp.sqrt(jnp.array(d_in, dtype=jnp.float32))
        w = (jax.random.normal(k_w, (d_in, d_out), dtype=jnp.float32) * scale).astype(dtype)
        b = (jax.random.normal(k_b, (d_out,), dtype=jnp.float32) * scale).astype(dtype)
        params.append((w, b))
    return params


if __name__ == "__main__":
    # Small shapes consistent with an MLP audio-embedding autoencoder.
    batch = 8
    enc_layer_sizes = [64, 32, 16]          # input -> hidden -> latent
    dec_layer_sizes = [16, 32, 64]          # latent -> hidden -> output

    # Mirror AutoEncoder._check_modules
    assert enc_layer_sizes[-1] == dec_layer_sizes[0], \
        "Output size of encoder is not equal with input of decoder."
    assert enc_layer_sizes[0] == dec_layer_sizes[-1], \
        "Input and ouput sizes of Autoencoder are not equal."

    key = jax.random.PRNGKey(0)
    k_x, k_enc, k_dec = jax.random.split(key, 3)

    x = jax.random.normal(k_x, (batch, enc_layer_sizes[0]), dtype=jnp.float32)
    enc_params = init_mlp_params(k_enc, enc_layer_sizes)
    dec_params = init_mlp_params(k_dec, dec_layer_sizes)

    # One-time (init) padding; the per-call forward path does no pad/slice.
    prepared = prepare_autoencoder_params(enc_params, dec_params,
                                          compute_dtype=jnp.float32)

    y = autoencoder_apply(x, prepared)
    y = jax.block_until_ready(y)

    assert y.shape == (batch, dec_layer_sizes[-1]), y.shape
    assert y.dtype == jnp.float32

    # Cross-check the fused kernel against a pure-JAX reference.
    def ref_forward(x, enc, dec):
        h = x
        for i, (w, b) in enumerate(enc):
            h = h @ w + b
            if i < len(enc) - 1:
                h = jnp.maximum(h, 0.0)
        for i, (w, b) in enumerate(dec):
            h = h @ w + b
            if i < len(dec) - 1:
                h = jnp.maximum(h, 0.0)
        return h

    y_ref = ref_forward(x, enc_params, dec_params)
    assert jnp.allclose(y, y_ref, atol=1e-5, rtol=1e-5), \
        float(jnp.max(jnp.abs(y - y_ref)))

    print("KERNEL_OK")
</pallas_src>

<mosaic_0001>
module attributes {stable_mosaic.version = 11 : i64} {
  func.func @_autoencoder_kernel(%arg0: i32, %arg1: memref<8x64xf32, #tpu.memory_space<vmem>>, %arg2: memref<64x128xf32, #tpu.memory_space<vmem>>, %arg3: memref<1x128xf32, #tpu.memory_space<vmem>>, %arg4: memref<128x128xf32, #tpu.memory_space<vmem>>, %arg5: memref<1x128xf32, #tpu.memory_space<vmem>>, %arg6: memref<128x128xf32, #tpu.memory_space<vmem>>, %arg7: memref<1x128xf32, #tpu.memory_space<vmem>>, %arg8: memref<128x64xf32, #tpu.memory_space<vmem>>, %arg9: memref<1x64xf32, #tpu.memory_space<vmem>>, %arg10: memref<8x64xf32, #tpu.memory_space<vmem>>) attributes {dimension_semantics = [#tpu.dimension_semantics<parallel>], iteration_bounds = array<i64: 1>, scalar_prefetch = 0 : i64, scratch_operands = 0 : i64, tpu.core_type = #tpu.core_type<tc>, window_params = [{transform_indices = @transform_0, window_bounds = array<i64: 8, 64>}, {pipeline_mode = #tpu.pipeline_mode<synchronous>, transform_indices = @transform_1, window_bounds = array<i64: 64, 128>}, {pipeline_mode = #tpu.pipeline_mode<synchronous>, transform_indices = @transform_2, window_bounds = array<i64: 1, 128>}, {pipeline_mode = #tpu.pipeline_mode<synchronous>, transform_indices = @transform_3, window_bounds = array<i64: 128, 128>}, {pipeline_mode = #tpu.pipeline_mode<synchronous>, transform_indices = @transform_4, window_bounds = array<i64: 1, 128>}, {pipeline_mode = #tpu.pipeline_mode<synchronous>, transform_indices = @transform_5, window_bounds = array<i64: 128, 128>}, {pipeline_mode = #tpu.pipeline_mode<synchronous>, transform_indices = @transform_6, window_bounds = array<i64: 1, 128>}, {pipeline_mode = #tpu.pipeline_mode<synchronous>, transform_indices = @transform_7, window_bounds = array<i64: 128, 64>}, {pipeline_mode = #tpu.pipeline_mode<synchronous>, transform_indices = @transform_8, window_bounds = array<i64: 1, 64>}, {transform_indices = @transform_9, window_bounds = array<i64: 8, 64>}]} {
    %c0 = arith.constant 0 : index
    %c0_0 = arith.constant 0 : index
    %0 = vector.load %arg1[%c0, %c0_0] : memref<8x64xf32, #tpu.memory_space<vmem>>, vector<8x64xf32>
    %c0_1 = arith.constant 0 : index
    %c0_2 = arith.constant 0 : index
    %1 = vector.load %arg2[%c0_1, %c0_2] : memref<64x128xf32, #tpu.memory_space<vmem>>, vector<64x128xf32>
    %c0_3 = arith.constant 0 : index
    %c0_4 = arith.constant 0 : index
    %2 = vector.load %arg3[%c0_3, %c0_4] : memref<1x128xf32, #tpu.memory_space<vmem>>, vector<1x128xf32>
    %cst = arith.constant dense<0.000000e+00> : vector<8x128xf32>
    %3 = tpu.matmul %0, %1, %cst {dimension_numbers = #tpu.dot_dimension_numbers<[1], [0], [0], [1], [0, 0, 1, 1], [], []>} : vector<8x64xf32>, vector<64x128xf32>, vector<8x128xf32> -> vector<8x128xf32>
    %4 = vector.broadcast %2 : vector<1x128xf32> to vector<8x128xf32>
    %5 = arith.addf %3, %4 : vector<8x128xf32>
    %cst_5 = arith.constant 0.000000e+00 : f32
    %6 = vector.broadcast %cst_5 : f32 to vector<8x128xf32>
    %7 = arith.maximumf %5, %6 : vector<8x128xf32>
    %c0_6 = arith.constant 0 : index
    %c0_7 = arith.constant 0 : index
    %8 = vector.load %arg4[%c0_6, %c0_7] : memref<128x128xf32, #tpu.memory_space<vmem>>, vector<128x128xf32>
    %c0_8 = arith.constant 0 : index
    %c0_9 = arith.constant 0 : index
    %9 = vector.load %arg5[%c0_8, %c0_9] : memref<1x128xf32, #tpu.memory_space<vmem>>, vector<1x128xf32>
    %cst_10 = arith.constant dense<0.000000e+00> : vector<8x128xf32>
    %10 = tpu.matmul %7, %8, %cst_10 {dimension_numbers = #tpu.dot_dimension_numbers<[1], [0], [0], [1], [0, 0, 1, 1], [], []>} : vector<8x128xf32>, vector<128x128xf32>, vector<8x128xf32> -> vector<8x128xf32>
    %11 = vector.broadcast %9 : vector<1x128xf32> to vector<8x128xf32>
    %12 = arith.addf %10, %11 : vector<8x128xf32>
    %c0_11 = arith.constant 0 : index
    %c0_12 = arith.constant 0 : index
    %13 = vector.load %arg6[%c0_11, %c0_12] : memref<128x128xf32, #tpu.memory_space<vmem>>, vector<128x128xf32>
    %c0_13 = arith.constant 0 : index
    %c0_14 = arith.constant 0 : index
    %14 = vector.load %arg7[%c0_13, %c0_14] : memref<1x128xf32, #tpu.memory_space<vmem>>, vector<1x128xf32>
    %cst_15 = arith.constant dense<0.000000e+00> : vector<8x128xf32>
    %15 = tpu.matmul %12, %13, %cst_15 {dimension_numbers = #tpu.dot_dimension_numbers<[1], [0], [0], [1], [0, 0, 1, 1], [], []>} : vector<8x128xf32>, vector<128x128xf32>, vector<8x128xf32> -> vector<8x128xf32>
    %16 = vector.broadcast %14 : vector<1x128xf32> to vector<8x128xf32>
    %17 = arith.addf %15, %16 : vector<8x128xf32>
    %cst_16 = arith.constant 0.000000e+00 : f32
    %18 = vector.broadcast %cst_16 : f32 to vector<8x128xf32>
    %19 = arith.maximumf %17, %18 : vector<8x128xf32>
    %c0_17 = arith.constant 0 : index
    %c0_18 = arith.constant 0 : index
    %20 = vector.load %arg8[%c0_17, %c0_18] : memref<128x64xf32, #tpu.memory_space<vmem>>, vector<128x64xf32>
    %c0_19 = arith.constant 0 : index
    %c0_20 = arith.constant 0 : index
    %21 = vector.load %arg9[%c0_19, %c0_20] : memref<1x64xf32, #tpu.memory_space<vmem>>, vector<1x64xf32>
    %cst_21 = arith.constant dense<0.000000e+00> : vector<8x64xf32>
    %22 = tpu.matmul %19, %20, %cst_21 {dimension_numbers = #tpu.dot_dimension_numbers<[1], [0], [0], [1], [0, 0, 1, 1], [], []>} : vector<8x128xf32>, vector<128x64xf32>, vector<8x64xf32> -> vector<8x64xf32>
    %23 = vector.broadcast %21 : vector<1x64xf32> to vector<8x64xf32>
    %24 = arith.addf %22, %23 : vector<8x64xf32>
    %c0_22 = arith.constant 0 : index
    %c0_23 = arith.constant 0 : index
    %25 = vector.load %arg10[%c0_22, %c0_23] : memref<8x64xf32, #tpu.memory_space<vmem>>, vector<8x64xf32>
    tpu.vector_store %arg10[%c0_22, %c0_23], %24 {strides = array<i32>} : memref<8x64xf32, #tpu.memory_space<vmem>>, vector<8x64xf32>,
    return
  }
  func.func @transform_0(%arg0: i32) -> (i32, i32) {
    %c0_i32 = arith.constant 0 : i32
    %c0_i32_0 = arith.constant 0 : i32
    return %arg0, %c0_i32 : i32, i32
  }
  func.func @transform_1(%arg0: i32) -> (i32, i32) {
    %c0_i32 = arith.constant 0 : i32
    %c0_i32_0 = arith.constant 0 : i32
    %c0_i32_1 = arith.constant 0 : i32
    return %c0_i32, %c0_i32_0 : i32, i32
  }
  func.func @transform_2(%arg0: i32) -> (i32, i32) {
    %c0_i32 = arith.constant 0 : i32
    %c0_i32_0 = arith.constant 0 : i32
    %c0_i32_1 = arith.constant 0 : i32
    return %c0_i32, %c0_i32_0 : i32, i32
  }
  func.func @transform_3(%arg0: i32) -> (i32, i32) {
    %c0_i32 = arith.constant 0 : i32
    %c0_i32_0 = arith.constant 0 : i32
    %c0_i32_1 = arith.constant 0 : i32
    return %c0_i32, %c0_i32_0 : i32, i32
  }
  func.func @transform_4(%arg0: i32) -> (i32, i32) {
    %c0_i32 = arith.constant 0 : i32
    %c0_i32_0 = arith.constant 0 : i32
    %c0_i32_1 = arith.constant 0 : i32
    return %c0_i32, %c0_i32_0 : i32, i32
  }
  func.func @transform_5(%arg0: i32) -> (i32, i32) {
    %c0_i32 = arith.constant 0 : i32
    %c0_i32_0 = arith.constant 0 : i32
    %c0_i32_1 = arith.constant 0 : i32
    return %c0_i32, %c0_i32_0 : i32, i32
  }
  func.func @transform_6(%arg0: i32) -> (i32, i32) {
    %c0_i32 = arith.constant 0 : i32
    %c0_i32_0 = arith.constant 0 : i32
    %c0_i32_1 = arith.constant 0 : i32
    return %c0_i32, %c0_i32_0 : i32, i32
  }
  func.func @transform_7(%arg0: i32) -> (i32, i32) {
    %c0_i32 = arith.constant 0 : i32
    %c0_i32_0 = arith.constant 0 : i32
    %c0_i32_1 = arith.constant 0 : i32
    return %c0_i32, %c0_i32_0 : i32, i32
  }
  func.func @transform_8(%arg0: i32) -> (i32, i32) {
    %c0_i32 = arith.constant 0 : i32
    %c0_i32_0 = arith.constant 0 : i32
    %c0_i32_1 = arith.constant 0 : i32
    return %c0_i32, %c0_i32_0 : i32, i32
  }
  func.func @transform_9(%arg0: i32) -> (i32, i32) {
    %c0_i32 = arith.constant 0 : i32
    %c0_i32_0 = arith.constant 0 : i32
    return %arg0, %c0_i32 : i32, i32
  }
}

</mosaic_0001>

<llo_original>
// kernel: tpu_custom_call.1
$region0: #{tpu_custom_call.1}
  #allocation0 [shape = 'u32[]', space=smem, size = 0x4, offset = 0x4, fixed_abs, tag = 'smem constant byte address 0x4 - core index']
  #allocation1 [shape = 'u32[144,128]{1,0:T(1,128)}', space=vmem, size = 0x12000, scoped, tag = 'internal scratch']
  %s0 = inlined_call_operand.vmem [shape: f32[8,64], index: 0, kind: input, shape index: {}]
  %s1 = inlined_call_operand.vmem [shape: f32[64,128], index: 1, kind: input, shape index: {}]
  %s2 = inlined_call_operand.vmem [shape: f32[1,128], index: 2, kind: input, shape index: {}]
  %s3 = inlined_call_operand.vmem [shape: f32[128,128], index: 3, kind: input, shape index: {}]
  %s4 = inlined_call_operand.vmem [shape: f32[1,128], index: 4, kind: input, shape index: {}]
  %s5 = inlined_call_operand.hbm [shape: f32[128,128], index: 5, kind: input, shape index: {}]
  %s6 = inlined_call_operand.vmem [shape: f32[1,128], index: 6, kind: input, shape index: {}]
  %s7 = inlined_call_operand.vmem [shape: f32[128,64], index: 7, kind: input, shape index: {}]
  %s8 = inlined_call_operand.vmem [shape: f32[1,64], index: 8, kind: input, shape index: {}]
  %s9 = inlined_call_operand.hbm [shape: f32[8,64], index: 9, kind: output, shape index: {}]
  %s10 = sld [smem:[#allocation0]]
  $region50: #{tpu_custom_call.1} parent=0
    _
  %s12 = ssub.s32 1, %s10
  %s13 = scalar_select 0, %s12, %s10
  $region1: #{tpu_custom_call.1} parent=0
    #allocation2 [shape = 'u8[65536]{0}', space=vmem, size = 0x10000, scoped, tag = 'input window, operand 5, single buffered']
    #allocation3 [shape = 's32[1]{0}', space=sflag, size = 0x4, scoped, tag = 'scoped memory for tpu_custom_call.1']
    #allocation4 [shape = 's32[1]{0}', space=sflag, size = 0x4, scoped, tag = 'scoped memory for tpu_custom_call.1']
    #allocation5 [shape = 'u8[4096]{0}', space=vmem, size = 0x1000, scoped, tag = 'output window, operand 0, single buffered']
    %14 = vsyncpa [#allocation3], 0
    %15 = vsyncpa [#allocation4], 0
    // Predicated region
    $region2: #{tpu_custom_call.1} parent=1 // pred_check
      _
    $region3: #{tpu_custom_call.1} parent=1 // pred_check_branch
      %17 = sbr.rel (0) target = $region5
    $region4: #{tpu_custom_call.1} parent=1 // pred_region
      _
    $region5: #{tpu_custom_call.1} parent=1 // pred_fallthru
      _
    // Predicated region
    $region6: #{tpu_custom_call.1} parent=1 // pred_check
      _
    $region7: #{tpu_custom_call.1} parent=1 // pred_check_branch
      %19 = sbr.rel (0) target = $region9
    $region8: #{tpu_custom_call.1} parent=1 // pred_region
      _
    $region9: #{tpu_custom_call.1} parent=1 // pred_fallthru
      _
    // Predicated region
    $region10: #{tpu_custom_call.1} parent=1 // pred_check
      _
    $region11: #{tpu_custom_call.1} parent=1 // pred_check_branch
      %21 = sbr.rel (0) target = $region13
    $region12: #{tpu_custom_call.1} parent=1 // pred_region
      _
    $region13: #{tpu_custom_call.1} parent=1 // pred_fallthru
      _
    // Predicated region
    $region14: #{tpu_custom_call.1} parent=1 // pred_check
      _
    $region15: #{tpu_custom_call.1} parent=1 // pred_check_branch
      %23 = sbr.rel (0) target = $region17
    $region16: #{tpu_custom_call.1} parent=1 // pred_region
      _
    $region17: #{tpu_custom_call.1} parent=1 // pred_fallthru
      _
    // Predicated region
    $region18: #{tpu_custom_call.1} parent=1 // pred_check
      _
    $region19: #{tpu_custom_call.1} parent=1 // pred_check_branch
      %25 = sbr.rel (0) target = $region21
    $region20: #{tpu_custom_call.1} parent=1 // pred_region
      _
    $region21: #{tpu_custom_call.1} parent=1 // pred_fallthru
      _
    // Predicated region
    $region22: #{tpu_custom_call.1} parent=1 // pred_check
      _
    $region23: #{tpu_custom_call.1} parent=1 // pred_check_branch
      %27 = sbr.rel (0) target = $region25
    $region24: #{tpu_custom_call.1} parent=1 // pred_region
      %s29 = ssub.s32 2048, 2048
      %30 = vsyncadd [#allocation3], %s29
      %s31 = sshll.u32 [#allocation2], 4
      %s32 = int_to_ptr.vmem [resolvable:$true] %s31
      %37 = dma.hbm_to_vmem [thread:$0]  %s5, 2048, %s32, [#allocation3], 128, 128, 8
    $region25: #{tpu_custom_call.1} parent=1 // pred_fallthru
      _
    // Predicated region
    $region26: #{tpu_custom_call.1} parent=1 // pred_check
      _
    $region27: #{tpu_custom_call.1} parent=1 // pred_check_branch
      %39 = sbr.rel (0) target = $region29
    $region28: #{tpu_custom_call.1} parent=1 // pred_region
      _
    $region29: #{tpu_custom_call.1} parent=1 // pred_fallthru
      _
    // Predicated region
    $region30: #{tpu_custom_call.1} parent=1 // pred_check
      _
    $region31: #{tpu_custom_call.1} parent=1 // pred_check_branch
      %41 = sbr.rel (0) target = $region33
    $region32: #{tpu_custom_call.1} parent=1 // pred_region
      _
    $region33: #{tpu_custom_call.1} parent=1 // pred_fallthru
      _
    // Predicated region
    $region34: #{tpu_custom_call.1} parent=1 // pred_check
      _
    $region35: #{tpu_custom_call.1} parent=1 // pred_check_branch
      %43 = sbr.rel (0) target = $region37
    $region36: #{tpu_custom_call.1} parent=1 // pred_region
      _
    $region37: #{tpu_custom_call.1} parent=1 // pred_fallthru
      _
    // Predicated region
    $region38: #{tpu_custom_call.1} parent=1 // pred_check
      _
    $region39: #{tpu_custom_call.1} parent=1 // pred_check_branch
      %45 = sbr.rel (0) target = $region41
    $region40: #{tpu_custom_call.1} parent=1 // pred_region
      %46 = dma.done [#allocation3], 2048
    $region41: #{tpu_custom_call.1} parent=1 // pred_fallthru
      _
    %v47 = vld [vmem:[%s0] sm:$0xff]
    %v48 = vld [vmem:[%s1] sm:$0xff]
    %v49 = vld [vmem:[%s1 + $0x8] sm:$0xff]
    %v50 = vld [vmem:[%s1 + $0x10] sm:$0xff]
    %v51 = vld [vmem:[%s1 + $0x18] sm:$0xff]
    %v52 = vld [vmem:[%s1 + $0x20] sm:$0xff]
    %v53 = vld [vmem:[%s1 + $0x28] sm:$0xff]
    %v54 = vld [vmem:[%s1 + $0x30] sm:$0xff]
    %v55 = vld [vmem:[%s1 + $0x38] sm:$0xff]
    %v56 = vld [vmem:[%s2] sm:$0x1]
    %v58 = vlaneseq
    %v59 = vshrl.u32 %v58, 7
    %v60 = vsub.s32 0, %v59
    %v61 = vrot.slane %v56, %v60
    %vm63 = vcmask 523264
    %v65 = vsel %vm63, %v47, 0
    %67 = vmatprep.subr.mxu0 0.0
    %68 = vmatpush1.msra.mxu0 %v48
    %69 = vmatprep.subr.mxu0 0.0
    %70 = vmatpush1.msra.mxu0 %v49
    %71 = vmatprep.subr.mxu0 0.0
    %72 = vmatpush1.msra.mxu0 %v50
    %73 = vmatprep.subr.mxu0 0.0
    %74 = vmatpush1.msra.mxu0 %v51
    %75 = vmatprep.subr.mxu0 0.0
    %76 = vmatpush1.msra.mxu0 %v52
    %77 = vmatprep.subr.mxu0 0.0
    %78 = vmatpush1.msra.mxu0 %v53
    %79 = vmatprep.subr.mxu0 0.0
    %80 = vmatpush1.msra.mxu0 %v54
    %81 = vmatprep.subr.mxu0 0.0
    %82 = vmatpush1.msra.mxu0 %v55
    %83 = vmatprep.subr.mxu0 0.0
    %84 = vmatpush1.msra.mxu0 0.0
    %85 = vmatprep.subr.mxu0 0.0
    %86 = vmatpush1.msra.mxu0 0.0
    %87 = vmatprep.subr.mxu0 0.0
    %88 = vmatpush1.msra.mxu0 0.0
    %89 = vmatprep.subr.mxu0 0.0
    %90 = vmatpush1.msra.mxu0 0.0
    %91 = vmatprep.subr.mxu0 0.0
    %92 = vmatpush1.msra.mxu0 0.0
    %93 = vmatprep.subr.mxu0 0.0
    %94 = vmatpush1.msra.mxu0 0.0
    %95 = vmatprep.subr.mxu0 0.0
    %96 = vmatpush1.msra.mxu0 0.0
    %97 = vmatprep.subr.mxu0 0.0
    %98 = vmatpush1.msra.mxu0 0.0
    %99 = vmatprep.subr.mxu0 0.0
    %100 = vmatpush1.msra.mxu0 0.0
    %101 = vmatprep.subr.mxu0 0.0
    %102 = vmatpush1.msra.mxu0 0.0
    %103 = vmatprep.subr.mxu0 0.0
    %104 = vmatpush1.msra.mxu0 0.0
    %105 = vmatprep.subr.mxu0 0.0
    %106 = vmatpush1.msra.mxu0 0.0
    %107 = vmatprep.subr.mxu0 0.0
    %108 = vmatpush1.msra.mxu0 0.0
    %109 = vmatprep.subr.mxu0 0.0
    %110 = vmatpush1.msra.mxu0 0.0
    %111 = vmatprep.subr.mxu0 0.0
    %112 = vmatpush1.msra.mxu0 0.0
    %113 = vmatprep.subr.mxu0 0.0
    %114 = vmatpush1.msra.mxu0 0.0
    %115 = vmatprep.subr.mxu0 0.0
    %116 = vmatpush1.msra.mxu0 0.0
    %117 = vmatprep.subr.mxu0 0.0
    %118 = vmatpush1.msra.mxu0 0.0
    %119 = vmatprep.subr.mxu0 0.0
    %120 = vmatpush1.msra.mxu0 0.0
    %121 = vmatprep.subr.mxu0 0.0
    %122 = vmatpush1.msra.mxu0 0.0
    %123 = vmatprep.subr.mxu0 0.0
    %124 = vmatpush1.msra.mxu0 0.0
    %125 = vmatprep.subr.mxu0 0.0
    %126 = vmatpush1.msra.mxu0 0.0
    %127 = vmatprep.subr.mxu0 0.0
    %128 = vmatpush1.msra.mxu0 0.0
    %129 = vmatprep.subr.mxu0 0.0
    %130 = vmatpush1.msra.mxu0 0.0
    %131 = vmatprep.mubr.f32.mxu0 0.0
    %132 = vmatmul.mubr.f32.gmra.mrb[0].mxu0 %v65
    %v133 = vpop.f32.mrb[0].mxu0
    %v134 = vadd.f32 %v61, %v133
    %v135 = vpop.f32.mrb[0].mxu0
    %136 = vdwg.mxu0
    %v137 = vmax.f32 %v134, 0.0
    %v138 = vld [vmem:[%s3] sm:$0xff]
    %v139 = vld [vmem:[%s3 + $0x8] sm:$0xff]
    %v140 = vld [vmem:[%s3 + $0x10] sm:$0xff]
    %v141 = vld [vmem:[%s3 + $0x18] sm:$0xff]
    %v142 = vld [vmem:[%s3 + $0x20] sm:$0xff]
    %v143 = vld [vmem:[%s3 + $0x28] sm:$0xff]
    %v144 = vld [vmem:[%s3 + $0x30] sm:$0xff]
    %v145 = vld [vmem:[%s3 + $0x38] sm:$0xff]
    %v146 = vld [vmem:[%s3 + $0x40] sm:$0xff]
    %v147 = vld [vmem:[%s3 + $0x48] sm:$0xff]
    %v148 = vld [vmem:[%s3 + $0x50] sm:$0xff]
    %v149 = vld [vmem:[%s3 + $0x58] sm:$0xff]
    %v150 = vld [vmem:[%s3 + $0x60] sm:$0xff]
    %v151 = vld [vmem:[%s3 + $0x68] sm:$0xff]
    %v152 = vld [vmem:[%s3 + $0x70] sm:$0xff]
    %v153 = vld [vmem:[%s3 + $0x78] sm:$0xff]
    %v154 = vld [vmem:[%s4] sm:$0x1]
    %v156 = vlaneseq
    %v157 = vshrl.u32 %v156, 7
    %v158 = vsub.s32 0, %v157
    %v159 = vrot.slane %v154, %v158
    %161 = vmatprep.subr.mxu0 0.0
    %162 = vmatpush1.msra.mxu0 %v138
    %163 = vmatprep.subr.mxu0 0.0
    %164 = vmatpush1.msra.mxu0 %v139
    %165 = vmatprep.subr.mxu0 0.0
    %166 = vmatpush1.msra.mxu0 %v140
    %167 = vmatprep.subr.mxu0 0.0
    %168 = vmatpush1.msra.mxu0 %v141
    %169 = vmatprep.subr.mxu0 0.0
    %170 = vmatpush1.msra.mxu0 %v142
    %171 = vmatprep.subr.mxu0 0.0
    %172 = vmatpush1.msra.mxu0 %v143
    %173 = vmatprep.subr.mxu0 0.0
    %174 = vmatpush1.msra.mxu0 %v144
    %175 = vmatprep.subr.mxu0 0.0
    %176 = vmatpush1.msra.mxu0 %v145
    %177 = vmatprep.subr.mxu0 0.0
    %178 = vmatpush1.msra.mxu0 %v146
    %179 = vmatprep.subr.mxu0 0.0
    %180 = vmatpush1.msra.mxu0 %v147
    %181 = vmatprep.subr.mxu0 0.0
    %182 = vmatpush1.msra.mxu0 %v148
    %183 = vmatprep.subr.mxu0 0.0
    %184 = vmatpush1.msra.mxu0 %v149
    %185 = vmatprep.subr.mxu0 0.0
    %186 = vmatpush1.msra.mxu0 %v150
    %187 = vmatprep.subr.mxu0 0.0
    %188 = vmatpush1.msra.mxu0 %v151
    %189 = vmatprep.subr.mxu0 0.0
    %190 = vmatpush1.msra.mxu0 %v152
    %191 = vmatprep.subr.mxu0 0.0
    %192 = vmatpush1.msra.mxu0 %v153
    %193 = vmatprep.subr.mxu0 0.0
    %194 = vmatpush1.msra.mxu0 0.0
    %195 = vmatprep.subr.mxu0 0.0
    %196 = vmatpush1.msra.mxu0 0.0
    %197 = vmatprep.subr.mxu0 0.0
    %198 = vmatpush1.msra.mxu0 0.0
    %199 = vmatprep.subr.mxu0 0.0
    %200 = vmatpush1.msra.mxu0 0.0
    %201 = vmatprep.subr.mxu0 0.0
    %202 = vmatpush1.msra.mxu0 0.0
    %203 = vmatprep.subr.mxu0 0.0
    %204 = vmatpush1.msra.mxu0 0.0
    %205 = vmatprep.subr.mxu0 0.0
    %206 = vmatpush1.msra.mxu0 0.0
    %207 = vmatprep.subr.mxu0 0.0
    %208 = vmatpush1.msra.mxu0 0.0
    %209 = vmatprep.subr.mxu0 0.0
    %210 = vmatpush1.msra.mxu0 0.0
    %211 = vmatprep.subr.mxu0 0.0
    %212 = vmatpush1.msra.mxu0 0.0
    %213 = vmatprep.subr.mxu0 0.0
    %214 = vmatpush1.msra.mxu0 0.0
    %215 = vmatprep.subr.mxu0 0.0
    %216 = vmatpush1.msra.mxu0 0.0
    %217 = vmatprep.subr.mxu0 0.0
    %218 = vmatpush1.msra.mxu0 0.0
    %219 = vmatprep.subr.mxu0 0.0
    %220 = vmatpush1.msra.mxu0 0.0
    %221 = vmatprep.subr.mxu0 0.0
    %222 = vmatpush1.msra.mxu0 0.0
    %223 = vmatprep.subr.mxu0 0.0
    %224 = vmatpush1.msra.mxu0 0.0
    %225 = vmatprep.mubr.f32.mxu0 0.0
    %226 = vmatmul.mubr.f32.gmra.mrb[0].mxu0 %v137
    %v227 = vpop.f32.mrb[0].mxu0
    %v228 = vadd.f32 %v159, %v227
    %v229 = vpop.f32.mrb[0].mxu0
    %230 = vdwg.mxu0
    %v231 = vld [vmem:[#allocation2] sm:$0xff]
    %v232 = vld [vmem:[#allocation2 + $0x8] sm:$0xff]
    %v233 = vld [vmem:[#allocation2 + $0x10] sm:$0xff]
    %v234 = vld [vmem:[#allocation2 + $0x18] sm:$0xff]
    %v235 = vld [vmem:[#allocation2 + $0x20] sm:$0xff]
    %v236 = vld [vmem:[#allocation2 + $0x28] sm:$0xff]
    %v237 = vld [vmem:[#allocation2 + $0x30] sm:$0xff]
    %v238 = vld [vmem:[#allocation2 + $0x38] sm:$0xff]
    %v239 = vld [vmem:[#allocation2 + $0x40] sm:$0xff]
    %v240 = vld [vmem:[#allocation2 + $0x48] sm:$0xff]
    %v241 = vld [vmem:[#allocation2 + $0x50] sm:$0xff]
    %v242 = vld [vmem:[#allocation2 + $0x58] sm:$0xff]
    %v243 = vld [vmem:[#allocation2 + $0x60] sm:$0xff]
    %v244 = vld [vmem:[#allocation2 + $0x68] sm:$0xff]
    %v245 = vld [vmem:[#allocation2 + $0x70] sm:$0xff]
    %v246 = vld [vmem:[#allocation2 + $0x78] sm:$0xff]
    %v247 = vld [vmem:[%s6] sm:$0x1]
    %v249 = vlaneseq
    %v250 = vshrl.u32 %v249, 7
    %v251 = vsub.s32 0, %v250
    %v252 = vrot.slane %v247, %v251
    %254 = vmatprep.subr.mxu0 0.0
    %255 = vmatpush1.msra.mxu0 %v231
    %256 = vmatprep.subr.mxu0 0.0
    %257 = vmatpush1.msra.mxu0 %v232
    %258 = vmatprep.subr.mxu0 0.0
    %259 = vmatpush1.msra.mxu0 %v233
    %260 = vmatprep.subr.mxu0 0.0
    %261 = vmatpush1.msra.mxu0 %v234
    %262 = vmatprep.subr.mxu0 0.0
    %263 = vmatpush1.msra.mxu0 %v235
    %264 = vmatprep.subr.mxu0 0.0
    %265 = vmatpush1.msra.mxu0 %v236
    %266 = vmatprep.subr.mxu0 0.0
    %267 = vmatpush1.msra.mxu0 %v237
    %268 = vmatprep.subr.mxu0 0.0
    %269 = vmatpush1.msra.mxu0 %v238
    %270 = vmatprep.subr.mxu0 0.0
    %271 = vmatpush1.msra.mxu0 %v239
    %272 = vmatprep.subr.mxu0 0.0
    %273 = vmatpush1.msra.mxu0 %v240
    %274 = vmatprep.subr.mxu0 0.0
    %275 = vmatpush1.msra.mxu0 %v241
    %276 = vmatprep.subr.mxu0 0.0
    %277 = vmatpush1.msra.mxu0 %v242
    %278 = vmatprep.subr.mxu0 0.0
    %279 = vmatpush1.msra.mxu0 %v243
    %280 = vmatprep.subr.mxu0 0.0
    %281 = vmatpush1.msra.mxu0 %v244
    %282 = vmatprep.subr.mxu0 0.0
    %283 = vmatpush1.msra.mxu0 %v245
    %284 = vmatprep.subr.mxu0 0.0
    %285 = vmatpush1.msra.mxu0 %v246
    %286 = vmatprep.subr.mxu0 0.0
    %287 = vmatpush1.msra.mxu0 0.0
    %288 = vmatprep.subr.mxu0 0.0
    %289 = vmatpush1.msra.mxu0 0.0
    %290 = vmatprep.subr.mxu0 0.0
    %291 = vmatpush1.msra.mxu0 0.0
    %292 = vmatprep.subr.mxu0 0.0
    %293 = vmatpush1.msra.mxu0 0.0
    %294 = vmatprep.subr.mxu0 0.0
    %295 = vmatpush1.msra.mxu0 0.0
    %296 = vmatprep.subr.mxu0 0.0
    %297 = vmatpush1.msra.mxu0 0.0
    %298 = vmatprep.subr.mxu0 0.0
    %299 = vmatpush1.msra.mxu0 0.0
    %300 = vmatprep.subr.mxu0 0.0
    %301 = vmatpush1.msra.mxu0 0.0
    %302 = vmatprep.subr.mxu0 0.0
    %303 = vmatpush1.msra.mxu0 0.0
    %304 = vmatprep.subr.mxu0 0.0
    %305 = vmatpush1.msra.mxu0 0.0
    %306 = vmatprep.subr.mxu0 0.0
    %307 = vmatpush1.msra.mxu0 0.0
    %308 = vmatprep.subr.mxu0 0.0
    %309 = vmatpush1.msra.mxu0 0.0
    %310 = vmatprep.subr.mxu0 0.0
    %311 = vmatpush1.msra.mxu0 0.0
    %312 = vmatprep.subr.mxu0 0.0
    %313 = vmatpush1.msra.mxu0 0.0
    %314 = vmatprep.subr.mxu0 0.0
    %315 = vmatpush1.msra.mxu0 0.0
    %316 = vmatprep.subr.mxu0 0.0
    %317 = vmatpush1.msra.mxu0 0.0
    %318 = vmatprep.mubr.f32.mxu0 0.0
    %319 = vmatmul.mubr.f32.gmra.mrb[0].mxu0 %v228
    %v320 = vpop.f32.mrb[0].mxu0
    %v321 = vadd.f32 %v252, %v320
    %v322 = vpop.f32.mrb[0].mxu0
    %323 = vdwg.mxu0
    %v324 = vmax.f32 %v321, 0.0
    %v325 = vld [vmem:[%s7] sm:$0xff]
    %v326 = vld [vmem:[%s7 + $0x8] sm:$0xff]
    %v327 = vld [vmem:[%s7 + $0x10] sm:$0xff]
    %v328 = vld [vmem:[%s7 + $0x18] sm:$0xff]
    %v329 = vld [vmem:[%s7 + $0x20] sm:$0xff]
    %v330 = vld [vmem:[%s7 + $0x28] sm:$0xff]
    %v331 = vld [vmem:[%s7 + $0x30] sm:$0xff]
    %v332 = vld [vmem:[%s7 + $0x38] sm:$0xff]
    %v333 = vld [vmem:[%s7 + $0x40] sm:$0xff]
    %v334 = vld [vmem:[%s7 + $0x48] sm:$0xff]
    %v335 = vld [vmem:[%s7 + $0x50] sm:$0xff]
    %v336 = vld [vmem:[%s7 + $0x58] sm:$0xff]
    %v337 = vld [vmem:[%s7 + $0x60] sm:$0xff]
    %v338 = vld [vmem:[%s7 + $0x68] sm:$0xff]
    %v339 = vld [vmem:[%s7 + $0x70] sm:$0xff]
    %v340 = vld [vmem:[%s7 + $0x78] sm:$0xff]
    %v341 = vld [vmem:[%s8] sm:$0x1]
    %v343 = vlaneseq
    %v344 = vshrl.u32 %v343, 7
    %v345 = vsub.s32 0, %v344
    %v346 = vrot.slane %v341, %v345
    %348 = vmatprep.subr.mxu0 0.0
    %349 = vmatpush1.msra.mxu0 %v325
    %350 = vmatprep.subr.mxu0 0.0
    %351 = vmatpush1.msra.mxu0 %v326
    %352 = vmatprep.subr.mxu0 0.0
    %353 = vmatpush1.msra.mxu0 %v327
    %354 = vmatprep.subr.mxu0 0.0
    %355 = vmatpush1.msra.mxu0 %v328
    %356 = vmatprep.subr.mxu0 0.0
    %357 = vmatpush1.msra.mxu0 %v329
    %358 = vmatprep.subr.mxu0 0.0
    %359 = vmatpush1.msra.mxu0 %v330
    %360 = vmatprep.subr.mxu0 0.0
    %361 = vmatpush1.msra.mxu0 %v331
    %362 = vmatprep.subr.mxu0 0.0
    %363 = vmatpush1.msra.mxu0 %v332
    %364 = vmatprep.subr.mxu0 0.0
    %365 = vmatpush1.msra.mxu0 %v333
    %366 = vmatprep.subr.mxu0 0.0
    %367 = vmatpush1.msra.mxu0 %v334
    %368 = vmatprep.subr.mxu0 0.0
    %369 = vmatpush1.msra.mxu0 %v335
    %370 = vmatprep.subr.mxu0 0.0
    %371 = vmatpush1.msra.mxu0 %v336
    %372 = vmatprep.subr.mxu0 0.0
    %373 = vmatpush1.msra.mxu0 %v337
    %374 = vmatprep.subr.mxu0 0.0
    %375 = vmatpush1.msra.mxu0 %v338
    %376 = vmatprep.subr.mxu0 0.0
    %377 = vmatpush1.msra.mxu0 %v339
    %378 = vmatprep.subr.mxu0 0.0
    %379 = vmatpush1.msra.mxu0 %v340
    %380 = vmatprep.subr.mxu0 0.0
    %381 = vmatpush1.msra.mxu0 0.0
    %382 = vmatprep.subr.mxu0 0.0
    %383 = vmatpush1.msra.mxu0 0.0
    %384 = vmatprep.subr.mxu0 0.0
    %385 = vmatpush1.msra.mxu0 0.0
    %386 = vmatprep.subr.mxu0 0.0
    %387 = vmatpush1.msra.mxu0 0.0
    %388 = vmatprep.subr.mxu0 0.0
    %389 = vmatpush1.msra.mxu0 0.0
    %390 = vmatprep.subr.mxu0 0.0
    %391 = vmatpush1.msra.mxu0 0.0
    %392 = vmatprep.subr.mxu0 0.0
    %393 = vmatpush1.msra.mxu0 0.0
    %394 = vmatprep.subr.mxu0 0.0
    %395 = vmatpush1.msra.mxu0 0.0
    %396 = vmatprep.subr.mxu0 0.0
    %397 = vmatpush1.msra.mxu0 0.0
    %398 = vmatprep.subr.mxu0 0.0
    %399 = vmatpush1.msra.mxu0 0.0
    %400 = vmatprep.subr.mxu0 0.0
    %401 = vmatpush1.msra.mxu0 0.0
    %402 = vmatprep.subr.mxu0 0.0
    %403 = vmatpush1.msra.mxu0 0.0
    %404 = vmatprep.subr.mxu0 0.0
    %405 = vmatpush1.msra.mxu0 0.0
    %406 = vmatprep.subr.mxu0 0.0
    %407 = vmatpush1.msra.mxu0 0.0
    %408 = vmatprep.subr.mxu0 0.0
    %409 = vmatpush1.msra.mxu0 0.0
    %410 = vmatprep.subr.mxu0 0.0
    %411 = vmatpush1.msra.mxu0 0.0
    %412 = vmatprep.mubr.f32.mxu0 0.0
    %413 = vmatmul.mubr.f32.gmra.mrb[0].mxu0 %v324
    %v414 = vpop.f32.mrb[0].mxu0
    %v415 = vadd.f32 %v346, %v414
    %v416 = vpop.f32.mrb[0].mxu0
    %417 = vdwg.mxu0
    %418 = vst.msk [vmem:[#allocation5] sm:$0xff] %vm63, %v415
    // Predicated region
    $region42: #{tpu_custom_call.1} parent=1 // pred_check
      _
    $region43: #{tpu_custom_call.1} parent=1 // pred_check_branch
      %420 = sbr.rel (0) target = $region45
    $region44: #{tpu_custom_call.1} parent=1 // pred_region
      %s422 = ssub.s32 128, 128
      %423 = vsyncadd [#allocation4], %s422
      %s425 = sshll.u32 [#allocation5], 4
      %s426 = int_to_ptr.vmem [resolvable:$true] %s425
      %428 = dma.vmem_to_hbm [thread:$0]  %s426, 128, %s9, [#allocation4]
    $region45: #{tpu_custom_call.1} parent=1 // pred_fallthru
      _
    // Predicated region
    $region46: #{tpu_custom_call.1} parent=1 // pred_check
      _
    $region47: #{tpu_custom_call.1} parent=1 // pred_check_branch
      %430 = sbr.rel (0) target = $region49
    $region48: #{tpu_custom_call.1} parent=1 // pred_region
      %431 = dma.done [#allocation4], 128
    $region49: #{tpu_custom_call.1} parent=1 // pred_fallthru
      _
    %432 = vsyncpa [#allocation3], 1
    %433 = vsyncpa [#allocation4], 1

</llo_original>
